<compile_context>
chip_gen: v6e
topology: v6e:2x2x1
jax: 0.10.0
libtpu: 0.0.40
codegen_flags: <defaults>
</compile_context>

<pallas_src>
import jax
import jax.numpy as jnp
from jax import lax
from jax.experimental import pallas as pl
from jax.experimental.pallas import tpu as pltpu


def _round_up(v, m):
    return ((v + m - 1) // m) * m


def _linear_kernel(x_ref, w_ref, b_ref, o_ref, acc_ref):
    # x_ref  : [tm, tk]       activation tile
    # w_ref  : [tn, tk]       weight tile, PyTorch layout (rows = labels, cols = features)
    # b_ref  : [1,  tn]       bias tile
    # o_ref  : [tm, tn]       output tile (resident across the k axis)
    # acc_ref: [tm, tn] f32   accumulator scratch
    k = pl.program_id(2)

    @pl.when(k == 0)
    def _():
        acc_ref[...] = jnp.zeros_like(acc_ref)

    # x @ W.T on the MXU: contract the feature axis of both operands directly
    # (trans_b handled natively) — no transposed weight copy in HBM or VMEM.
    acc_ref[...] += lax.dot_general(
        x_ref[...], w_ref[...],
        dimension_numbers=(((1,), (1,)), ((), ())),
        preferred_element_type=jnp.float32)

    @pl.when(k == pl.num_programs(2) - 1)
    def _():
        o_ref[...] = (acc_ref[...] + b_ref[...].astype(jnp.float32)).astype(o_ref.dtype)


def linear_classifier_forward(x, weight, bias, inputmap=False):
    """Pallas implementation of LinearClassifier.forward.

    x      : NCHW activation tensor, shape (B, c, h, w)
    weight : (num_labels, dim)   -- PyTorch nn.Linear convention (no transpose needed)
    bias   : (num_labels,)
    """
    if inputmap:
        B, c, h, w = x.shape
        # TODO(synk): NCHW -> (B*h*w, c) rearrange stays plain-JAX glue; folding it
        # into the in_spec index_map would need a strided Element mapping.
        x2d = jnp.transpose(x, (0, 2, 3, 1)).reshape(B * h * w, c)
    else:
        x2d = x.reshape(x.shape[0], -1)

    M, dim = x2d.shape
    L = weight.shape[0]
    assert weight.shape[1] == dim, "feature dim mismatch"

    # ---- tile sizing: MXU-friendly, (8,128)-legal, small-M kept as one block ----
    tm = min(256, _round_up(M, 8))       # don't tile tiny batch dims
    tn = min(256, _round_up(L, 128))     # lane-dense output tiles
    tk = min(512, _round_up(dim, 128))   # reduction chunk streamed from HBM
    M_pad = _round_up(M, tm)
    L_pad = _round_up(L, tn)
    K_pad = _round_up(dim, tk)

    x_p = x2d if (M_pad == M and K_pad == dim) else jnp.pad(
        x2d, ((0, M_pad - M), (0, K_pad - dim)))
    w_p = weight if (L_pad == L and K_pad == dim) else jnp.pad(
        weight, ((0, L_pad - L), (0, K_pad - dim)))
    b_p = (bias if L_pad == L else jnp.pad(bias, (0, L_pad - L))).reshape(1, L_pad)

    grid = (M_pad // tm, L_pad // tn, K_pad // tk)

    cost = pl.CostEstimate(
        flops=2 * M_pad * K_pad * L_pad,
        transcendentals=0,
        bytes_accessed=4 * (M_pad * K_pad + K_pad * L_pad + M_pad * L_pad))

    out = pl.pallas_call(
        _linear_kernel,
        out_shape=jax.ShapeDtypeStruct((M_pad, L_pad), x2d.dtype),
        grid_spec=pltpu.PrefetchScalarGridSpec(
            num_scalar_prefetch=0,
            grid=grid,
            in_specs=[
                pl.BlockSpec((tm, tk), lambda i, j, k: (i, k)),   # activations
                pl.BlockSpec((tn, tk), lambda i, j, k: (j, k)),   # weight (L, dim) tiles
                pl.BlockSpec((1, tn), lambda i, j, k: (0, j)),    # bias
            ],
            out_specs=pl.BlockSpec((tm, tn), lambda i, j, k: (i, j)),
            scratch_shapes=[pltpu.VMEM((tm, tn), jnp.float32)],
        ),
        compiler_params=pltpu.CompilerParams(
            dimension_semantics=("parallel", "parallel", "arbitrary")),
        cost_estimate=cost,
    )(x_p, w_p, b_p)

    if M_pad != M or L_pad != L:
        out = out[:M, :L]
    return out


def init_linear_classifier_params(key, dim, num_labels=1000, dtype=jnp.float32):
    # Matches nn.Linear(dim, num_labels) with weight ~ N(0, 0.01), bias = 0.
    w = 0.01 * jax.random.normal(key, (num_labels, dim), dtype=dtype)
    b = jnp.zeros((num_labels,), dtype=dtype)
    return w, b


if __name__ == "__main__":
    key = jax.random.PRNGKey(0)
    k_x, k_w = jax.random.split(key)

    # Shapes consistent with the module.
    B, c, h, w = 2, 4, 16, 16
    x = jax.random.normal(k_x, (B, c, h, w), dtype=jnp.float32)

    # ---- default path: inputmap=False, dim = c*h*w = 1024, L = 1000 (pads to 1024) ----
    dim_flat = c * h * w
    num_labels = 1000
    W, bvec = init_linear_classifier_params(k_w, dim_flat, num_labels)
    y = linear_classifier_forward(x, W, bvec, inputmap=False)
    jax.block_until_ready(y)

    y_ref = jnp.dot(x.reshape(B, -1), W.T,
                    precision=lax.Precision.HIGHEST) + bvec
    assert y.shape == (B, num_labels)
    assert jnp.allclose(y, y_ref, atol=1e-3, rtol=1e-3)

    # ---- inputmap=True path: dim = c = 4, rows = B*h*w = 512, L = 128 ----
    num_labels2 = 128
    W2, b2 = init_linear_classifier_params(k_w, c, num_labels2)
    y2 = linear_classifier_forward(x, W2, b2, inputmap=True)
    jax.block_until_ready(y2)

    x_re = jnp.transpose(x, (0, 2, 3, 1)).reshape(B * h * w, c)
    y2_ref = jnp.dot(x_re, W2.T, precision=lax.Precision.HIGHEST) + b2
    assert y2.shape == (B * h * w, num_labels2)
    assert jnp.allclose(y2, y2_ref, atol=1e-3, rtol=1e-3)

    print("KERNEL_OK")
</pallas_src>

<mosaic_0001>
module attributes {stable_mosaic.version = 11 : i64} {
  func.func @_linear_kernel(%arg0: i32, %arg1: i32, %arg2: i32, %arg3: memref<8x512xf32, #tpu.memory_space<vmem>>, %arg4: memref<256x512xf32, #tpu.memory_space<vmem>>, %arg5: memref<1x256xf32, #tpu.memory_space<vmem>>, %arg6: memref<8x256xf32, #tpu.memory_space<vmem>>, %arg7: memref<8x256xf32, #tpu.memory_space<vmem>>) attributes {dimension_semantics = [#tpu.dimension_semantics<parallel>, #tpu.dimension_semantics<parallel>, #tpu.dimension_semantics<arbitrary>], iteration_bounds = array<i64: 1, 4, 2>, scalar_prefetch = 0 : i64, scratch_operands = 1 : i64, tpu.core_type = #tpu.core_type<tc>, window_params = [{transform_indices = @transform_0, window_bounds = array<i64: 8, 512>}, {transform_indices = @transform_1, window_bounds = array<i64: 256, 512>}, {transform_indices = @transform_2, window_bounds = array<i64: 1, 256>}, {transform_indices = @transform_3, window_bounds = array<i64: 8, 256>}]} {
    %c0_i32 = arith.constant 0 : i32
    %0 = arith.cmpi eq, %arg2, %c0_i32 : i32
    %1 = arith.extui %0 : i1 to i32
    %c0_i32_0 = arith.constant 0 : i32
    %2 = arith.cmpi ne, %1, %c0_i32_0 : i32
    scf.if %2 {
      %cst_9 = arith.constant 0.000000e+00 : f32
      %12 = vector.broadcast %cst_9 : f32 to vector<8x256xf32>
      %c0_10 = arith.constant 0 : index
      %c0_11 = arith.constant 0 : index
      %13 = vector.load %arg7[%c0_10, %c0_11] : memref<8x256xf32, #tpu.memory_space<vmem>>, vector<8x256xf32>
      tpu.vector_store %arg7[%c0_10, %c0_11], %12 {strides = array<i32>} : memref<8x256xf32, #tpu.memory_space<vmem>>, vector<8x256xf32>,
    } else {
    }
    %c0 = arith.constant 0 : index
    %c0_1 = arith.constant 0 : index
    %3 = vector.load %arg7[%c0, %c0_1] : memref<8x256xf32, #tpu.memory_space<vmem>>, vector<8x256xf32>
    %c0_2 = arith.constant 0 : index
    %c0_3 = arith.constant 0 : index
    %4 = vector.load %arg3[%c0_2, %c0_3] : memref<8x512xf32, #tpu.memory_space<vmem>>, vector<8x512xf32>
    %c0_4 = arith.constant 0 : index
    %c0_5 = arith.constant 0 : index
    %5 = vector.load %arg4[%c0_4, %c0_5] : memref<256x512xf32, #tpu.memory_space<vmem>>, vector<256x512xf32>
    %cst = arith.constant dense<0.000000e+00> : vector<8x256xf32>
    %6 = tpu.matmul %4, %5, %cst {dimension_numbers = #tpu.dot_dimension_numbers<[1], [1], [0], [0], [0, 0, 1, 0], [], []>} : vector<8x512xf32>, vector<256x512xf32>, vector<8x256xf32> -> vector<8x256xf32>
    %7 = arith.addf %3, %6 : vector<8x256xf32>
    %c0_6 = arith.constant 0 : index
    %c0_7 = arith.constant 0 : index
    %8 = vector.load %arg7[%c0_6, %c0_7] : memref<8x256xf32, #tpu.memory_space<vmem>>, vector<8x256xf32>
    tpu.vector_store %arg7[%c0_6, %c0_7], %7 {strides = array<i32>} : memref<8x256xf32, #tpu.memory_space<vmem>>, vector<8x256xf32>,
    %c1_i32 = arith.constant 1 : i32
    %9 = arith.cmpi eq, %arg2, %c1_i32 : i32
    %10 = arith.extui %9 : i1 to i32
    %c0_i32_8 = arith.constant 0 : i32
    %11 = arith.cmpi ne, %10, %c0_i32_8 : i32
    scf.if %11 {
      %c0_9 = arith.constant 0 : index
      %c0_10 = arith.constant 0 : index
      %12 = vector.load %arg7[%c0_9, %c0_10] : memref<8x256xf32, #tpu.memory_space<vmem>>, vector<8x256xf32>
      %c0_11 = arith.constant 0 : index
      %c0_12 = arith.constant 0 : index
      %13 = vector.load %arg5[%c0_11, %c0_12] : memref<1x256xf32, #tpu.memory_space<vmem>>, vector<1x256xf32>
      %14 = vector.broadcast %13 : vector<1x256xf32> to vector<8x256xf32>
      %15 = arith.addf %12, %14 : vector<8x256xf32>
      %c0_13 = arith.constant 0 : index
      %c0_14 = arith.constant 0 : index
      %16 = vector.load %arg6[%c0_13, %c0_14] : memref<8x256xf32, #tpu.memory_space<vmem>>, vector<8x256xf32>
      tpu.vector_store %arg6[%c0_13, %c0_14], %15 {strides = array<i32>} : memref<8x256xf32, #tpu.memory_space<vmem>>, vector<8x256xf32>,
    } else {
    }
    return
  }
  func.func @transform_0(%arg0: i32, %arg1: i32, %arg2: i32) -> (i32, i32) {
    %c0_i32 = arith.constant 0 : i32
    return %arg0, %arg2 : i32, i32
  }
  func.func @transform_1(%arg0: i32, %arg1: i32, %arg2: i32) -> (i32, i32) {
    %c0_i32 = arith.constant 0 : i32
    return %arg1, %arg2 : i32, i32
  }
  func.func @transform_2(%arg0: i32, %arg1: i32, %arg2: i32) -> (i32, i32) {
    %c0_i32 = arith.constant 0 : i32
    %c0_i32_0 = arith.constant 0 : i32
    return %c0_i32, %arg1 : i32, i32
  }
  func.func @transform_3(%arg0: i32, %arg1: i32, %arg2: i32) -> (i32, i32) {
    %c0_i32 = arith.constant 0 : i32
    return %arg0, %arg1 : i32, i32
  }
}

</mosaic_0001>

<llo_original>
// kernel: tpu_custom_call.1
$region0: #{tpu_custom_call.1}
  #allocation0 [shape = 'u32[]', space=smem, size = 0x4, offset = 0x4, fixed_abs, tag = 'smem constant byte address 0x4 - core index']
  #allocation1 [shape = 'u32[144,128]{1,0:T(1,128)}', space=vmem, size = 0x12000, scoped, tag = 'internal scratch']
  #allocation2 [shape = 'f32[8,256]{1,0:T(8,128)}', space=vmem, size = 0x2000, scoped, tag = 'scratch operand']
  %s0 = inlined_call_operand.hbm [shape: f32[8,1024], index: 0, kind: input, shape index: {}]
  %s1 = inlined_call_operand.hbm [shape: f32[1024,1024], index: 1, kind: input, shape index: {}]
  %s2 = inlined_call_operand.hbm [shape: f32[1,1024], index: 2, kind: input, shape index: {}]
  %s3 = inlined_call_operand.hbm [shape: f32[8,1024], index: 3, kind: output, shape index: {}]
  %s4 = sld [smem:[#allocation0]]
  $region65: #{tpu_custom_call.1} parent=0
    _
  %s6 = ssub.s32 1, %s4
  %s7 = scalar_select 0, %s6, %s4
  $region1: #{tpu_custom_call.1} parent=0
    #allocation3 [shape = 'u8[32768]{0}', space=vmem, size = 0x8000, scoped, tag = 'input window, operand 0']
    #allocation4 [shape = 's32[2]{0}', space=sflag, size = 0x8, scoped, tag = 'scoped memory for tpu_custom_call.1']
    #allocation5 [shape = 's32[2]{0}', space=sflag, size = 0x8, scoped, tag = 'scoped memory for tpu_custom_call.1']
    #allocation6 [shape = 'u8[1048576]{0}', space=vmem, size = 0x100000, scoped, tag = 'input window, operand 1']
    #allocation7 [shape = 's32[2]{0}', space=sflag, size = 0x8, scoped, tag = 'scoped memory for tpu_custom_call.1']
    #allocation8 [shape = 'u8[2048]{0}', space=vmem, size = 0x800, scoped, tag = 'input window, operand 2']
    #allocation9 [shape = 'u8[16384]{0}', space=vmem, size = 0x4000, scoped, tag = 'output window, operand 0']
    %8 = vsyncpa [#allocation4], 0
    %s9 = scalar_lea.sflag [#allocation4], 1
    %10 = vsyncpa %s9, 0
    %11 = vsyncpa [#allocation7], 0
    %s12 = scalar_lea.sflag [#allocation7], 1
    %13 = vsyncpa %s12, 0
    %14 = vsyncpa [#allocation5], 0
    %s15 = scalar_lea.sflag [#allocation5], 1
    %16 = vsyncpa %s15, 0
    loop: start=0, step=1, limit=10
    $region2: #{tpu_custom_call.1} parent=1 // loop_pre_header
      _
    $region3: #{tpu_custom_call.1} parent=1 // loop_header
      %s18 = sphi 0, %s22
      %p19 = scmp.ge.s32.totalorder %s18, 10
      %s25 = sphi 0, %s44
      %s26 = sphi 0, %s40
      %s27 = sphi 0, %s36
      %s28 = sphi 0, %s25
      %s29 = sphi 0, %s26
      %s30 = sphi 0, %s27
      %s31 = sphi 0, %s28
      %s32 = sphi 0, %s29
      %s33 = sphi 0, %s30
      %s49 = sphi 0, %s51
      %s52 = sphi 0, %s49
      %s53 = sphi 0, %s52
      %s69 = sphi 0, %s53
      %s77 = sphi 0, %s79
      %s80 = sphi 0, %s77
      %s81 = sphi 0, %s80
      %s97 = sphi 0, %s81
      %s103 = sphi 0, %s105
      %s106 = sphi 0, %s103
      %s107 = sphi 0, %s106
      %s123 = sphi 0, %s107
      %s131 = sphi 0, %s133
      %s134 = sphi 0, %s131
      %s135 = sphi 0, %s134
      %s151 = sphi 0, %s135
    $region4: #{tpu_custom_call.1} parent=1 // loop_header_branch
      %21 = sbr.rel (%p19) target = $region8
    $region5: #{tpu_custom_call.1} parent=1 // loop_body
      %s23 = ssub.s32 %s18, 1
      %s24 = ssub.s32 %s18, 2
      %s34 = sadd.s32 1, %s27
      %p35 = scmp.ge.s32.totalorder %s34, 2
      %s36 = scalar_select %p35, 0, %s34
      %s37 = sadd.s32 1, %s26
      %s38 = scalar_select %p35, %s37, %s26
      %p39 = scmp.ge.s32.totalorder %s38, 4
      %s40 = scalar_select %p39, 0, %s38
      %s41 = sadd.s32 1, %s25
      %s42 = scalar_select %p39, %s41, %s25
      %p43 = scmp.ge.s32.totalorder %s42, 1
      %s44 = scalar_select %p43, 0, %s42
      %s45 = ssub.s32 %s25, %s44
      %s46 = ssub.s32 %s27, %s36
      %s47 = sor.u32 %s45, %s46
      %p48 = scmp.eq.s32.totalorder %s47, 0
      %s50 = sadd.s32 %s49, 1
      %s51 = scalar_select %p48, %s49, %s50
      %p54 = pneg %p48
      %p55 = scmp.eq.s32.totalorder %s18, 7
      %p56 = por %p54, %p55
      %p57 = scmp.ne.s32.totalorder %s49, %s52
      %p58 = scmp.eq.s32.totalorder %s18, 0
      %p59 = por %p57, %p58
      %p60 = scmp.ne.s32.totalorder %s49, %s52
      %p61 = scmp.eq.s32.totalorder %s23, 7
      %p62 = por %p60, %p61
      %p63 = scmp.ne.s32.totalorder %s52, %s53
      %p64 = scmp.eq.s32.totalorder %s23, 0
      %p65 = por %p63, %p64
      %p66 = scmp.ne.s32.totalorder %s52, %s53
      %p67 = scmp.eq.s32.totalorder %s24, 7
      %p68 = por %p66, %p67
      %p70 = scmp.ne.s32.totalorder %s53, %s69
      %p71 = scmp.eq.s32.totalorder %s24, 0
      %p72 = por %p70, %p71
      %s73 = ssub.s32 %s26, %s40
      %s74 = ssub.s32 %s27, %s36
      %s75 = sor.u32 %s73, %s74
      %p76 = scmp.eq.s32.totalorder %s75, 0
      %s78 = sadd.s32 %s77, 1
      %s79 = scalar_select %p76, %s77, %s78
      %p82 = pneg %p76
      %p83 = scmp.eq.s32.totalorder %s18, 7
      %p84 = por %p82, %p83
      %p85 = scmp.ne.s32.totalorder %s77, %s80
      %p86 = scmp.eq.s32.totalorder %s18, 0
      %p87 = por %p85, %p86
      %p88 = scmp.ne.s32.totalorder %s77, %s80
      %p89 = scmp.eq.s32.totalorder %s23, 7
      %p90 = por %p88, %p89
      %p91 = scmp.ne.s32.totalorder %s80, %s81
      %p92 = scmp.eq.s32.totalorder %s23, 0
      %p93 = por %p91, %p92
      %p94 = scmp.ne.s32.totalorder %s80, %s81
      %p95 = scmp.eq.s32.totalorder %s24, 7
      %p96 = por %p94, %p95
      %p98 = scmp.ne.s32.totalorder %s81, %s97
      %p99 = scmp.eq.s32.totalorder %s24, 0
      %p100 = por %p98, %p99
      %s101 = ssub.s32 %s26, %s40
      %p102 = scmp.eq.s32.totalorder %s101, 0
      %s104 = sadd.s32 %s103, 1
      %s105 = scalar_select %p102, %s103, %s104
      %p108 = pneg %p102
      %p109 = scmp.eq.s32.totalorder %s18, 7
      %p110 = por %p108, %p109
      %p111 = scmp.ne.s32.totalorder %s103, %s106
      %p112 = scmp.eq.s32.totalorder %s18, 0
      %p113 = por %p111, %p112
      %p114 = scmp.ne.s32.totalorder %s103, %s106
      %p115 = scmp.eq.s32.totalorder %s23, 7
      %p116 = por %p114, %p115
      %p117 = scmp.ne.s32.totalorder %s106, %s107
      %p118 = scmp.eq.s32.totalorder %s23, 0
      %p119 = por %p117, %p118
      %p120 = scmp.ne.s32.totalorder %s106, %s107
      %p121 = scmp.eq.s32.totalorder %s24, 7
      %p122 = por %p120, %p121
      %p124 = scmp.ne.s32.totalorder %s107, %s123
      %p125 = scmp.eq.s32.totalorder %s24, 0
      %p126 = por %p124, %p125
      %s127 = ssub.s32 %s25, %s44
      %s128 = ssub.s32 %s26, %s40
      %s129 = sor.u32 %s127, %s128
      %p130 = scmp.eq.s32.totalorder %s129, 0
      %s132 = sadd.s32 %s131, 1
      %s133 = scalar_select %p130, %s131, %s132
      %p136 = pneg %p130
      %p137 = scmp.eq.s32.totalorder %s18, 7
      %p138 = por %p136, %p137
      %p139 = scmp.ne.s32.totalorder %s131, %s134
      %p140 = scmp.eq.s32.totalorder %s18, 0
      %p141 = por %p139, %p140
      %p142 = scmp.ne.s32.totalorder %s131, %s134
      %p143 = scmp.eq.s32.totalorder %s23, 7
      %p144 = por %p142, %p143
      %p145 = scmp.ne.s32.totalorder %s134, %s135
      %p146 = scmp.eq.s32.totalorder %s23, 0
      %p147 = por %p145, %p146
      %p148 = scmp.ne.s32.totalorder %s134, %s135
      %p149 = scmp.eq.s32.totalorder %s24, 7
      %p150 = por %p148, %p149
      %p152 = scmp.ne.s32.totalorder %s135, %s151
      %p153 = scmp.eq.s32.totalorder %s24, 0
      %p154 = por %p152, %p153
      %p155 = scmp.le.s32.totalorder 1, %s18
      %p156 = scmp.lt.s32.totalorder %s18, 9
      %p157 = pnand %p155, %p156
      %p158 = pneg %p157
      // Predicated region
      $region9: #{tpu_custom_call.1} parent=5 // pred_check
        _
      $region10: #{tpu_custom_call.1} parent=5 // pred_check_branch
        %160 = sbr.rel (%p157) target = $region12
      $region11: #{tpu_custom_call.1} parent=5 // pred_region
        %s161 = ssub.s32 %s18, 1
      $region12: #{tpu_custom_call.1} parent=5 // pred_fallthru
        _
      %p162 = scmp.lt.s32.totalorder %s18, 8
      // Predicated region
      $region13: #{tpu_custom_call.1} parent=5 // pred_check
        %p163 = pneg %p162
      $region14: #{tpu_custom_call.1} parent=5 // pred_check_branch
        %165 = sbr.rel (%p163) target = $region16
      $region15: #{tpu_custom_call.1} parent=5 // pred_region
        // Predicated region
        $region17: #{tpu_custom_call.1} parent=15 // pred_check
          %p166 = pneg %p59
        $region18: #{tpu_custom_call.1} parent=15 // pred_check_branch
          %168 = sbr.rel (%p166) target = $region20
        $region19: #{tpu_custom_call.1} parent=15 // pred_region
          %s169 = sand.u32 %s49, 1
          %s170 = scalar_lea.sflag [#allocation4], %s169
          %s171 = sand.u32 %s49, 1
          %s172 = smul.addr %s171, 32
          %s173 = scalar_lea.vmem [#allocation3], %s172
          %s174 = smul.u32 4, %s27
          %s176 = ssub.s32 512, 512
          %177 = vsyncadd %s170, %s176
          %s178 = smul.addr %s25, 8
          %s179 = sadd.s32 %s174, %s178
          %s180 = smul.addr %s179, 128
          %s181 = scalar_lea.hbm %s0, %s180
          %s183 = sshll.u32 %s173, 4
          %s184 = int_to_ptr.vmem [resolvable:$true] %s183
          %186 = dma.hbm_to_vmem [thread:$0]  %s181, 512, %s184, %s170
        $region20: #{tpu_custom_call.1} parent=15 // pred_fallthru
          _
        // Predicated region
        $region21: #{tpu_custom_call.1} parent=15 // pred_check
          %p187 = pneg %p87
        $region22: #{tpu_custom_call.1} parent=15 // pred_check_branch
          %189 = sbr.rel (%p187) target = $region24
        $region23: #{tpu_custom_call.1} parent=15 // pred_region
          %s190 = sand.u32 %s18, 1
          %s191 = scalar_lea.sflag [#allocation7], %s190
          %s192 = sand.u32 %s77, 1
          %s193 = smul.addr %s192, 1024
          %s194 = scalar_lea.vmem [#allocation6], %s193
          %s195 = smul.u32 32, %s26
          %s196 = smul.u32 4, %s27
          %s198 = ssub.s32 16384, 16384
          %199 = vsyncadd %s191, %s198
          %s200 = smul.addr %s195, 8
          %s201 = sadd.s32 %s196, %s200
          %s202 = smul.addr %s201, 128
          %s203 = scalar_lea.hbm %s1, %s202
          %s204 = sshll.u32 %s194, 4
          %s205 = int_to_ptr.vmem [resolvable:$true] %s204
          %210 = dma.hbm_to_vmem [thread:$0]  %s203, 16384, %s205, %s191, 1024, 512, 32
        $region24: #{tpu_custom_call.1} parent=15 // pred_fallthru
          _
        // Predicated region
        $region25: #{tpu_custom_call.1} parent=15 // pred_check
          %p211 = pneg %p113
        $region26: #{tpu_custom_call.1} parent=15 // pred_check_branch
          %213 = sbr.rel (%p211) target = $region28
        $region27: #{tpu_custom_call.1} parent=15 // pred_region
          %s214 = sand.u32 %s18, 1
          %s215 = scalar_lea.sflag [#allocation7], %s214
          %s216 = sand.u32 %s103, 1
          %s217 = smul.addr %s216, 2
          %s218 = scalar_lea.vmem [#allocation8], %s217
          %s219 = smul.u32 2, %s26
          %s221 = ssub.s32 32, 32
          %222 = vsyncadd %s215, %s221
          %s223 = smul.addr %s219, 16
          %s224 = scalar_lea.hbm %s2, %s223
          %s226 = sshll.u32 %s218, 4
          %s227 = int_to_ptr.vmem [resolvable:$true] %s226
          %229 = dma.hbm_to_vmem [thread:$0]  %s224, 32, %s227, %s215
        $region28: #{tpu_custom_call.1} parent=15 // pred_fallthru
          _
      $region16: #{tpu_custom_call.1} parent=5 // pred_fallthru
        _
      %p230 = scmp.le.s32.totalorder 1, %s18
      %p231 = scmp.lt.s32.totalorder %s18, 9
      %p232 = pnand %p230, %p231
      %p233 = pneg %p232
      // Predicated region
      $region29: #{tpu_custom_call.1} parent=5 // pred_check
        _
      $region30: #{tpu_custom_call.1} parent=5 // pred_check_branch
        %235 = sbr.rel (%p232) target = $region32
      $region31: #{tpu_custom_call.1} parent=5 // pred_region
        %s236 = ssub.s32 %s18, 1
        %s237 = sand.u32 %s52, 1
        %s238 = scalar_lea.sflag [#allocation4], %s237
        %s239 = sand.u32 %s52, 1
        %s240 = smul.addr %s239, 32
        %s241 = scalar_lea.vmem [#allocation3], %s240
        // Predicated region
        $region33: #{tpu_custom_call.1} parent=31 // pred_check
          %p242 = pneg %p65
        $region34: #{tpu_custom_call.1} parent=31 // pred_check_branch
          %244 = sbr.rel (%p242) target = $region36
        $region35: #{tpu_custom_call.1} parent=31 // pred_region
          %245 = dma.done %s238, 512
        $region36: #{tpu_custom_call.1} parent=31 // pred_fallthru
          _
        %s246 = sand.u32 %s23, 1
        %s247 = scalar_lea.sflag [#allocation7], %s246
        %s248 = sand.u32 %s80, 1
        %s249 = smul.addr %s248, 1024
        %s250 = scalar_lea.vmem [#allocation6], %s249
        // Predicated region
        $region37: #{tpu_custom_call.1} parent=31 // pred_check
          %p251 = pneg %p93
        $region38: #{tpu_custom_call.1} parent=31 // pred_check_branch
          %253 = sbr.rel (%p251) target = $region40
        $region39: #{tpu_custom_call.1} parent=31 // pred_region
          %254 = dma.done %s247, 16384
        $region40: #{tpu_custom_call.1} parent=31 // pred_fallthru
          _
        %s255 = sand.u32 %s23, 1
        %s256 = scalar_lea.sflag [#allocation7], %s255
        %s257 = sand.u32 %s106, 1
        %s258 = smul.addr %s257, 2
        %s259 = scalar_lea.vmem [#allocation8], %s258
        // Predicated region
        $region41: #{tpu_custom_call.1} parent=31 // pred_check
          %p260 = pneg %p119
        $region42: #{tpu_custom_call.1} parent=31 // pred_check_branch
          %262 = sbr.rel (%p260) target = $region44
        $region43: #{tpu_custom_call.1} parent=31 // pred_region
          %263 = dma.done %s256, 32
        $region44: #{tpu_custom_call.1} parent=31 // pred_fallthru
          _
        %s264 = sand.u32 %s52, 1
        %s265 = scalar_lea.sflag [#allocation4], %s264
        %s266 = sand.u32 %s52, 1
        %s267 = smul.addr %s266, 32
        %s268 = scalar_lea.vmem [#allocation3], %s267
        %p269 = pneg %p65
        %p270 = pneg %p62
        %s271 = sand.u32 %s23, 1
        %s272 = scalar_lea.sflag [#allocation7], %s271
        %s273 = sand.u32 %s80, 1
        %s274 = smul.addr %s273, 1024
        %s275 = scalar_lea.vmem [#allocation6], %s274
        %p276 = pneg %p93
        %p277 = pneg %p90
        %s278 = sand.u32 %s23, 1
        %s279 = scalar_lea.sflag [#allocation7], %s278
        %s280 = sand.u32 %s106, 1
        %s281 = smul.addr %s280, 2
        %s282 = scalar_lea.vmem [#allocation8], %s281
        %p283 = pneg %p119
        %p284 = pneg %p116
        %p285 = pneg %p147
        %p286 = pneg %p144
        %s287 = sand.u32 %s134, 1
        %s288 = scalar_lea.sflag [#allocation5], %s287
        %s289 = sand.u32 %s134, 1
        %s290 = smul.addr %s289, 16
        %s291 = scalar_lea.vmem [#allocation9], %s290
        %s292 = smul.u32 4, %s30
        %s293 = smul.u32 32, %s29
        %s294 = smul.u32 4, %s30
        %s295 = smul.u32 2, %s29
        %s296 = smul.u32 2, %s29
        %p297 = scmp.eq.s32.totalorder %s30, 0
        // Predicated region
        $region45: #{tpu_custom_call.1} parent=31 // pred_check
          %p298 = pneg %p297
        $region46: #{tpu_custom_call.1} parent=31 // pred_check_branch
          %300 = sbr.rel (%p298) target = $region48
        $region47: #{tpu_custom_call.1} parent=31 // pred_region
          %301 = vst [vmem:[#allocation2] sm:$0xff] 0.0
          %302 = vst [vmem:[#allocation2 + $0x8] sm:$0xff] 0.0
        $region48: #{tpu_custom_call.1} parent=31 // pred_fallthru
          _
        %v303 = vld [vmem:[#allocation2] sm:$0xff]
        %v304 = vld [vmem:[#allocation2 + $0x8] sm:$0xff]
        %v305 = vld [vmem:[%s241] sm:$0xff]
        %v306 = vld [vmem:[%s241 + $0x8] sm:$0xff]
        %v307 = vld [vmem:[%s241 + $0x10] sm:$0xff]
        %v308 = vld [vmem:[%s241 + $0x18] sm:$0xff]
        %v309 = vld [vmem:[%s250] sm:$0xff]
        %v310 = vld [vmem:[%s250 + $0x8] sm:$0xff]
        %v311 = vld [vmem:[%s250 + $0x10] sm:$0xff]
        %v312 = vld [vmem:[%s250 + $0x18] sm:$0xff]
        %v313 = vld [vmem:[%s250 + $0x20] sm:$0xff]
        %v314 = vld [vmem:[%s250 + $0x28] sm:$0xff]
        %v315 = vld [vmem:[%s250 + $0x30] sm:$0xff]
        %v316 = vld [vmem:[%s250 + $0x38] sm:$0xff]
        %v317 = vld [vmem:[%s250 + $0x40] sm:$0xff]
        %v318 = vld [vmem:[%s250 + $0x48] sm:$0xff]
        %v319 = vld [vmem:[%s250 + $0x50] sm:$0xff]
        %v320 = vld [vmem:[%s250 + $0x58] sm:$0xff]
        %v321 = vld [vmem:[%s250 + $0x60] sm:$0xff]
        %v322 = vld [vmem:[%s250 + $0x68] sm:$0xff]
        %v323 = vld [vmem:[%s250 + $0x70] sm:$0xff]
        %v324 = vld [vmem:[%s250 + $0x78] sm:$0xff]
        %v325 = vld [vmem:[%s250 + $0x80] sm:$0xff]
        %v326 = vld [vmem:[%s250 + $0x88] sm:$0xff]
        %v327 = vld [vmem:[%s250 + $0x90] sm:$0xff]
        %v328 = vld [vmem:[%s250 + $0x98] sm:$0xff]
        %v329 = vld [vmem:[%s250 + $0xa0] sm:$0xff]
        %v330 = vld [vmem:[%s250 + $0xa8] sm:$0xff]
        %v331 = vld [vmem:[%s250 + $0xb0] sm:$0xff]
        %v332 = vld [vmem:[%s250 + $0xb8] sm:$0xff]
        %v333 = vld [vmem:[%s250 + $0xc0] sm:$0xff]
        %v334 = vld [vmem:[%s250 + $0xc8] sm:$0xff]
        %v335 = vld [vmem:[%s250 + $0xd0] sm:$0xff]
        %v336 = vld [vmem:[%s250 + $0xd8] sm:$0xff]
        %v337 = vld [vmem:[%s250 + $0xe0] sm:$0xff]
        %v338 = vld [vmem:[%s250 + $0xe8] sm:$0xff]
        %v339 = vld [vmem:[%s250 + $0xf0] sm:$0xff]
        %v340 = vld [vmem:[%s250 + $0xf8] sm:$0xff]
        %v341 = vld [vmem:[%s250 + $0x100] sm:$0xff]
        %v342 = vld [vmem:[%s250 + $0x108] sm:$0xff]
        %v343 = vld [vmem:[%s250 + $0x110] sm:$0xff]
        %v344 = vld [vmem:[%s250 + $0x118] sm:$0xff]
        %v345 = vld [vmem:[%s250 + $0x120] sm:$0xff]
        %v346 = vld [vmem:[%s250 + $0x128] sm:$0xff]
        %v347 = vld [vmem:[%s250 + $0x130] sm:$0xff]
        %v348 = vld [vmem:[%s250 + $0x138] sm:$0xff]
        %v349 = vld [vmem:[%s250 + $0x140] sm:$0xff]
        %v350 = vld [vmem:[%s250 + $0x148] sm:$0xff]
        %v351 = vld [vmem:[%s250 + $0x150] sm:$0xff]
        %v352 = vld [vmem:[%s250 + $0x158] sm:$0xff]
        %v353 = vld [vmem:[%s250 + $0x160] sm:$0xff]
        %v354 = vld [vmem:[%s250 + $0x168] sm:$0xff]
        %v355 = vld [vmem:[%s250 + $0x170] sm:$0xff]
        %v356 = vld [vmem:[%s250 + $0x178] sm:$0xff]
        %v357 = vld [vmem:[%s250 + $0x180] sm:$0xff]
        %v358 = vld [vmem:[%s250 + $0x188] sm:$0xff]
        %v359 = vld [vmem:[%s250 + $0x190] sm:$0xff]
        %v360 = vld [vmem:[%s250 + $0x198] sm:$0xff]
        %v361 = vld [vmem:[%s250 + $0x1a0] sm:$0xff]
        %v362 = vld [vmem:[%s250 + $0x1a8] sm:$0xff]
        %v363 = vld [vmem:[%s250 + $0x1b0] sm:$0xff]
        %v364 = vld [vmem:[%s250 + $0x1b8] sm:$0xff]
        %v365 = vld [vmem:[%s250 + $0x1c0] sm:$0xff]
        %v366 = vld [vmem:[%s250 + $0x1c8] sm:$0xff]
        %v367 = vld [vmem:[%s250 + $0x1d0] sm:$0xff]
        %v368 = vld [vmem:[%s250 + $0x1d8] sm:$0xff]
        %v369 = vld [vmem:[%s250 + $0x1e0] sm:$0xff]
        %v370 = vld [vmem:[%s250 + $0x1e8] sm:$0xff]
        %v371 = vld [vmem:[%s250 + $0x1f0] sm:$0xff]
        %v372 = vld [vmem:[%s250 + $0x1f8] sm:$0xff]
        %v373 = vld [vmem:[%s250 + $0x200] sm:$0xff]
        %v374 = vld [vmem:[%s250 + $0x208] sm:$0xff]
        %v375 = vld [vmem:[%s250 + $0x210] sm:$0xff]
        %v376 = vld [vmem:[%s250 + $0x218] sm:$0xff]
        %v377 = vld [vmem:[%s250 + $0x220] sm:$0xff]
        %v378 = vld [vmem:[%s250 + $0x228] sm:$0xff]
        %v379 = vld [vmem:[%s250 + $0x230] sm:$0xff]
        %v380 = vld [vmem:[%s250 + $0x238] sm:$0xff]
        %v381 = vld [vmem:[%s250 + $0x240] sm:$0xff]
        %v382 = vld [vmem:[%s250 + $0x248] sm:$0xff]
        %v383 = vld [vmem:[%s250 + $0x250] sm:$0xff]
        %v384 = vld [vmem:[%s250 + $0x258] sm:$0xff]
        %v385 = vld [vmem:[%s250 + $0x260] sm:$0xff]
        %v386 = vld [vmem:[%s250 + $0x268] sm:$0xff]
        %v387 = vld [vmem:[%s250 + $0x270] sm:$0xff]
        %v388 = vld [vmem:[%s250 + $0x278] sm:$0xff]
        %v389 = vld [vmem:[%s250 + $0x280] sm:$0xff]
        %v390 = vld [vmem:[%s250 + $0x288] sm:$0xff]
        %v391 = vld [vmem:[%s250 + $0x290] sm:$0xff]
        %v392 = vld [vmem:[%s250 + $0x298] sm:$0xff]
        %v393 = vld [vmem:[%s250 + $0x2a0] sm:$0xff]
        %v394 = vld [vmem:[%s250 + $0x2a8] sm:$0xff]
        %v395 = vld [vmem:[%s250 + $0x2b0] sm:$0xff]
        %v396 = vld [vmem:[%s250 + $0x2b8] sm:$0xff]
        %v397 = vld [vmem:[%s250 + $0x2c0] sm:$0xff]
        %v398 = vld [vmem:[%s250 + $0x2c8] sm:$0xff]
        %v399 = vld [vmem:[%s250 + $0x2d0] sm:$0xff]
        %v400 = vld [vmem:[%s250 + $0x2d8] sm:$0xff]
        %v401 = vld [vmem:[%s250 + $0x2e0] sm:$0xff]
        %v402 = vld [vmem:[%s250 + $0x2e8] sm:$0xff]
        %v403 = vld [vmem:[%s250 + $0x2f0] sm:$0xff]
        %v404 = vld [vmem:[%s250 + $0x2f8] sm:$0xff]
        %v405 = vld [vmem:[%s250 + $0x300] sm:$0xff]
        %v406 = vld [vmem:[%s250 + $0x308] sm:$0xff]
        %v407 = vld [vmem:[%s250 + $0x310] sm:$0xff]
        %v408 = vld [vmem:[%s250 + $0x318] sm:$0xff]
        %v409 = vld [vmem:[%s250 + $0x320] sm:$0xff]
        %v410 = vld [vmem:[%s250 + $0x328] sm:$0xff]
        %v411 = vld [vmem:[%s250 + $0x330] sm:$0xff]
        %v412 = vld [vmem:[%s250 + $0x338] sm:$0xff]
        %v413 = vld [vmem:[%s250 + $0x340] sm:$0xff]
        %v414 = vld [vmem:[%s250 + $0x348] sm:$0xff]
        %v415 = vld [vmem:[%s250 + $0x350] sm:$0xff]
        %v416 = vld [vmem:[%s250 + $0x358] sm:$0xff]
        %v417 = vld [vmem:[%s250 + $0x360] sm:$0xff]
        %v418 = vld [vmem:[%s250 + $0x368] sm:$0xff]
        %v419 = vld [vmem:[%s250 + $0x370] sm:$0xff]
        %v420 = vld [vmem:[%s250 + $0x378] sm:$0xff]
        %v421 = vld [vmem:[%s250 + $0x380] sm:$0xff]
        %v422 = vld [vmem:[%s250 + $0x388] sm:$0xff]
        %v423 = vld [vmem:[%s250 + $0x390] sm:$0xff]
        %v424 = vld [vmem:[%s250 + $0x398] sm:$0xff]
        %v425 = vld [vmem:[%s250 + $0x3a0] sm:$0xff]
        %v426 = vld [vmem:[%s250 + $0x3a8] sm:$0xff]
        %v427 = vld [vmem:[%s250 + $0x3b0] sm:$0xff]
        %v428 = vld [vmem:[%s250 + $0x3b8] sm:$0xff]
        %v429 = vld [vmem:[%s250 + $0x3c0] sm:$0xff]
        %v430 = vld [vmem:[%s250 + $0x3c8] sm:$0xff]
        %v431 = vld [vmem:[%s250 + $0x3d0] sm:$0xff]
        %v432 = vld [vmem:[%s250 + $0x3d8] sm:$0xff]
        %v433 = vld [vmem:[%s250 + $0x3e0] sm:$0xff]
        %v434 = vld [vmem:[%s250 + $0x3e8] sm:$0xff]
        %v435 = vld [vmem:[%s250 + $0x3f0] sm:$0xff]
        %v436 = vld [vmem:[%s250 + $0x3f8] sm:$0xff]
        %437 = vmatprep.subr.mxu0 %v370
        %438 = vmatpush1.xpose.msra.mxu0 %v369
        %439 = vmatprep.subr.mxu0 %v366
        %440 = vmatpush1.xpose.msra.mxu0 %v365
        %441 = vmatprep.subr.mxu0 %v362
        %442 = vmatpush1.xpose.msra.mxu0 %v361
        %443 = vmatprep.subr.mxu0 %v358
        %444 = vmatpush1.xpose.msra.mxu0 %v357
        %445 = vmatprep.subr.mxu0 %v354
        %446 = vmatpush1.xpose.msra.mxu0 %v353
        %447 = vmatprep.subr.mxu0 %v350
        %448 = vmatpush1.xpose.msra.mxu0 %v349
        %449 = vmatprep.subr.mxu0 %v346
        %450 = vmatpush1.xpose.msra.mxu0 %v345
        %451 = vmatprep.subr.mxu0 %v342
        %452 = vmatpush1.xpose.msra.mxu0 %v341
        %453 = vmatprep.subr.mxu0 %v338
        %454 = vmatpush1.xpose.msra.mxu0 %v337
        %455 = vmatprep.subr.mxu0 %v334
        %456 = vmatpush1.xpose.msra.mxu0 %v333
        %457 = vmatprep.subr.mxu0 %v330
        %458 = vmatpush1.xpose.msra.mxu0 %v329
        %459 = vmatprep.subr.mxu0 %v326
        %460 = vmatpush1.xpose.msra.mxu0 %v325
        %461 = vmatprep.subr.mxu0 %v322
        %462 = vmatpush1.xpose.msra.mxu0 %v321
        %463 = vmatprep.subr.mxu0 %v318
        %464 = vmatpush1.xpose.msra.mxu0 %v317
        %465 = vmatprep.subr.mxu0 %v314
        %466 = vmatpush1.xpose.msra.mxu0 %v313
        %467 = vmatprep.subr.mxu0 %v310
        %468 = vmatpush1.xpose.msra.mxu0 %v309
        %469 = vmatprep.subr.mxu0 %v434
        %470 = vmatpush2.xpose.msra.mxu0 %v433
        %471 = vmatprep.subr.mxu0 %v430
        %472 = vmatpush2.xpose.msra.mxu0 %v429
        %473 = vmatprep.subr.mxu0 %v426
        %474 = vmatpush2.xpose.msra.mxu0 %v425
        %475 = vmatprep.subr.mxu0 %v422
        %476 = vmatpush2.xpose.msra.mxu0 %v421
        %477 = vmatprep.subr.mxu0 %v418
        %478 = vmatpush2.xpose.msra.mxu0 %v417
        %479 = vmatprep.subr.mxu0 %v414
        %480 = vmatpush2.xpose.msra.mxu0 %v413
        %481 = vmatprep.subr.mxu0 %v410
        %482 = vmatpush2.xpose.msra.mxu0 %v409
        %483 = vmatprep.subr.mxu0 %v406
        %484 = vmatpush2.xpose.msra.mxu0 %v405
        %485 = vmatprep.subr.mxu0 %v402
        %486 = vmatpush2.xpose.msra.mxu0 %v401
        %487 = vmatprep.subr.mxu0 %v398
        %488 = vmatpush2.xpose.msra.mxu0 %v397
        %489 = vmatprep.subr.mxu0 %v394
        %490 = vmatpush2.xpose.msra.mxu0 %v393
        %491 = vmatprep.subr.mxu0 %v390
        %492 = vmatpush2.xpose.msra.mxu0 %v389
        %493 = vmatprep.subr.mxu0 %v386
        %494 = vmatpush2.xpose.msra.mxu0 %v385
        %495 = vmatprep.subr.mxu0 %v382
        %496 = vmatpush2.xpose.msra.mxu0 %v381
        %497 = vmatprep.subr.mxu0 %v378
        %498 = vmatpush2.xpose.msra.mxu0 %v377
        %499 = vmatprep.subr.mxu0 %v374
        %500 = vmatpush2.xpose.msra.mxu0 %v373
        %501 = vmatprep.mubr.f32.mxu0 %v306
        %502 = vmatmul.mubr.f32.gmra.mxu0 %v305
        %v503 = vpop.f32.mrf.mxu0
        %v504 = vadd.f32 0.0, %v503
        %v505 = vpop.f32.mrf.mxu0
        %v506 = vadd.f32 0.0, %v505
        %507 = vdwg.mxu0
        %508 = vmatprep.subr.mxu0 %v372
        %509 = vmatpush1.xpose.msra.mxu0 %v371
        %510 = vmatprep.subr.mxu0 %v368
        %511 = vmatpush1.xpose.msra.mxu0 %v367
        %512 = vmatprep.subr.mxu0 %v364
        %513 = vmatpush1.xpose.msra.mxu0 %v363
        %514 = vmatprep.subr.mxu0 %v360
        %515 = vmatpush1.xpose.msra.mxu0 %v359
        %516 = vmatprep.subr.mxu0 %v356
        %517 = vmatpush1.xpose.msra.mxu0 %v355
        %518 = vmatprep.subr.mxu0 %v352
        %519 = vmatpush1.xpose.msra.mxu0 %v351
        %520 = vmatprep.subr.mxu0 %v348
        %521 = vmatpush1.xpose.msra.mxu0 %v347
        %522 = vmatprep.subr.mxu0 %v344
        %523 = vmatpush1.xpose.msra.mxu0 %v343
        %524 = vmatprep.subr.mxu0 %v340
        %525 = vmatpush1.xpose.msra.mxu0 %v339
        %526 = vmatprep.subr.mxu0 %v336
        %527 = vmatpush1.xpose.msra.mxu0 %v335
        %528 = vmatprep.subr.mxu0 %v332
        %529 = vmatpush1.xpose.msra.mxu0 %v331
        %530 = vmatprep.subr.mxu0 %v328
        %531 = vmatpush1.xpose.msra.mxu0 %v327
        %532 = vmatprep.subr.mxu0 %v324
        %533 = vmatpush1.xpose.msra.mxu0 %v323
        %534 = vmatprep.subr.mxu0 %v320
        %535 = vmatpush1.xpose.msra.mxu0 %v319
        %536 = vmatprep.subr.mxu0 %v316
        %537 = vmatpush1.xpose.msra.mxu0 %v315
        %538 = vmatprep.subr.mxu0 %v312
        %539 = vmatpush1.xpose.msra.mxu0 %v311
        %540 = vmatprep.subr.mxu0 %v436
        %541 = vmatpush2.xpose.msra.mxu0 %v435
        %542 = vmatprep.subr.mxu0 %v432
        %543 = vmatpush2.xpose.msra.mxu0 %v431
        %544 = vmatprep.subr.mxu0 %v428
        %545 = vmatpush2.xpose.msra.mxu0 %v427
        %546 = vmatprep.subr.mxu0 %v424
        %547 = vmatpush2.xpose.msra.mxu0 %v423
        %548 = vmatprep.subr.mxu0 %v420
        %549 = vmatpush2.xpose.msra.mxu0 %v419
        %550 = vmatprep.subr.mxu0 %v416
        %551 = vmatpush2.xpose.msra.mxu0 %v415
        %552 = vmatprep.subr.mxu0 %v412
        %553 = vmatpush2.xpose.msra.mxu0 %v411
        %554 = vmatprep.subr.mxu0 %v408
        %555 = vmatpush2.xpose.msra.mxu0 %v407
        %556 = vmatprep.subr.mxu0 %v404
        %557 = vmatpush2.xpose.msra.mxu0 %v403
        %558 = vmatprep.subr.mxu0 %v400
        %559 = vmatpush2.xpose.msra.mxu0 %v399
        %560 = vmatprep.subr.mxu0 %v396
        %561 = vmatpush2.xpose.msra.mxu0 %v395
        %562 = vmatprep.subr.mxu0 %v392
        %563 = vmatpush2.xpose.msra.mxu0 %v391
        %564 = vmatprep.subr.mxu0 %v388
        %565 = vmatpush2.xpose.msra.mxu0 %v387
        %566 = vmatprep.subr.mxu0 %v384
        %567 = vmatpush2.xpose.msra.mxu0 %v383
        %568 = vmatprep.subr.mxu0 %v380
        %569 = vmatpush2.xpose.msra.mxu0 %v379
        %570 = vmatprep.subr.mxu0 %v376
        %571 = vmatpush2.xpose.msra.mxu0 %v375
        %572 = vmatprep.mubr.f32.mxu0 %v308
        %573 = vmatmul.mubr.f32.gmra.mxu0 %v307
        %v574 = vpop.f32.mrf.mxu0
        %v575 = vadd.f32 %v504, %v574
        %v576 = vpop.f32.mrf.mxu0
        %v577 = vadd.f32 %v506, %v576
        %578 = vdwg.mxu0
        %v579 = vadd.f32 %v303, %v575
        %v580 = vadd.f32 %v304, %v577
        %581 = vst [vmem:[#allocation2] sm:$0xff] %v579
        %582 = vst [vmem:[#allocation2 + $0x8] sm:$0xff] %v580
        %p583 = scmp.eq.s32.totalorder %s30, 1
        // Predicated region
        $region49: #{tpu_custom_call.1} parent=31 // pred_check
          %p584 = pneg %p583
        $region50: #{tpu_custom_call.1} parent=31 // pred_check_branch
          %586 = sbr.rel (%p584) target = $region52
        $region51: #{tpu_custom_call.1} parent=31 // pred_region
          %v587 = vld [vmem:[#allocation2] sm:$0xff]
          %v588 = vld [vmem:[#allocation2 + $0x8] sm:$0xff]
          %v589 = vld [vmem:[%s259] sm:$0x3]
          %v591 = vlaneseq
          %v592 = vshrl.u32 %v591, 7
          %v593 = vsub.s32 0, %v592
          %v594 = vrot.slane %v589, %v593
          %v595 = vlaneseq
          %v596 = vshrl.u32 %v595, 7
          %v597 = vsub.s32 1, %v596
          %v598 = vrot.slane %v589, %v597
          %v601 = vadd.f32 %v587, %v594
          %v602 = vadd.f32 %v588, %v598
          %603 = vst [vmem:[%s291] sm:$0xff] %v601
          %604 = vst [vmem:[%s291 + $0x8] sm:$0xff] %v602
        $region52: #{tpu_custom_call.1} parent=31 // pred_fallthru
          _
        %s605 = sand.u32 %s134, 1
        %s606 = scalar_lea.sflag [#allocation5], %s605
        %s607 = sand.u32 %s134, 1
        %s608 = smul.addr %s607, 16
        %s609 = scalar_lea.vmem [#allocation9], %s608
        // Predicated region
        $region53: #{tpu_custom_call.1} parent=31 // pred_check
          %p610 = pneg %p144
        $region54: #{tpu_custom_call.1} parent=31 // pred_check_branch
          %612 = sbr.rel (%p610) target = $region56
        $region55: #{tpu_custom_call.1} parent=31 // pred_region
          %s613 = smul.u32 2, %s29
          %s615 = ssub.s32 256, 256
          %616 = vsyncadd %s606, %s615
          %s617 = smul.addr %s28, 8
          %s618 = sadd.s32 %s613, %s617
          %s619 = smul.addr %s618, 128
          %s620 = scalar_lea.hbm %s3, %s619
          %s622 = sshll.u32 %s609, 4
          %s623 = int_to_ptr.vmem [resolvable:$true] %s622
          %625 = dma.vmem_to_hbm [thread:$0]  %s623, 256, %s620, %s606
        $region56: #{tpu_custom_call.1} parent=31 // pred_fallthru
          _
      $region32: #{tpu_custom_call.1} parent=5 // pred_fallthru
        _
      %p626 = scmp.le.s32.totalorder 2, %s18
      // Predicated region
      $region57: #{tpu_custom_call.1} parent=5 // pred_check
        %p627 = pneg %p626
      $region58: #{tpu_custom_call.1} parent=5 // pred_check_branch
        %629 = sbr.rel (%p627) target = $region60
      $region59: #{tpu_custom_call.1} parent=5 // pred_region
        %s630 = ssub.s32 %s18, 2
        // Predicated region
        $region61: #{tpu_custom_call.1} parent=59 // pred_check
          %p631 = pneg %p150
        $region62: #{tpu_custom_call.1} parent=59 // pred_check_branch
          %633 = sbr.rel (%p631) target = $region64
        $region63: #{tpu_custom_call.1} parent=59 // pred_region
          %s634 = sand.u32 %s135, 1
          %s635 = scalar_lea.sflag [#allocation5], %s634
          %s636 = sand.u32 %s135, 1
          %s637 = smul.addr %s636, 16
          %s638 = scalar_lea.vmem [#allocation9], %s637
          %639 = dma.done %s635, 256
        $region64: #{tpu_custom_call.1} parent=59 // pred_fallthru
          _
      $region60: #{tpu_custom_call.1} parent=5 // pred_fallthru
        _
    $region6: #{tpu_custom_call.1} parent=1 // loop_footer
      %s22 = sadd.s32 1, %s18
    $region7: #{tpu_custom_call.1} parent=1 // loop_footer_branch
      %17 = sbr.rel target = $region3
    $region8: #{tpu_custom_call.1} parent=1 // loop_exit
      _
    %640 = vsyncpa [#allocation4], 1
    %s641 = scalar_lea.sflag [#allocation4], 1
    %642 = vsyncpa %s641, 1
    %643 = vsyncpa [#allocation7], 1
    %s644 = scalar_lea.sflag [#allocation7], 1
    %645 = vsyncpa %s644, 1
    %646 = vsyncpa [#allocation5], 1
    %s647 = scalar_lea.sflag [#allocation5], 1
    %648 = vsyncpa %s647, 1

</llo_original>
